<compile_context>
chip_gen: v6e
topology: v6e:2x2x1
jax: 0.10.0
libtpu: 0.0.40
codegen_flags: <defaults>
</compile_context>

<pallas_src>
import jax
import jax.numpy as jnp
from jax.experimental import pallas as pl
from jax.experimental.pallas import tpu as pltpu

ROW_ALIGN = 16            # keep batch tiles a multiple of 16 (bf16 (16,128) packing)
VMEM_BUDGET = 28 << 20    # conservative double-buffer budget (under 32 MiB scoped)


def _round_up(x, m):
    return (x + m - 1) // m * m


def _cdiv(a, b):
    return (a + b - 1) // b


def linear_kernel(x_ref, w_ref, b_ref, o_ref):
    # x_ref: [TB, K] f32 (streamed; cast to bf16 here, hidden under DMA)
    # w_ref: [K, N]  bf16 (resident)
    # b_ref: [1, N]  f32  (resident)
    # o_ref: [TB, N] out_dtype (unpadded: N equals the full array dim)
    x = x_ref[...].astype(w_ref.dtype)
    acc = jnp.dot(x, w_ref[...], preferred_element_type=jnp.float32)
    # Module forward returns raw linear outputs (no sigmoid), so no activation.
    o_ref[...] = (acc + b_ref[...]).astype(o_ref.dtype)


def prepare_params(weight, bias, *, compute_dtype=jnp.bfloat16):
    """One-time parameter prep (call at init, not per forward).

    PyTorch layout weight [N, K] -> [K, N] in compute_dtype, bias [N] -> [1, N] f32.
    No lane padding: N stays the true output_dim.
    """
    w = weight.T.astype(compute_dtype)                       # [K, N]
    b = bias.astype(jnp.float32)[None, :]                    # [1, N]
    return w, b


def _choose_tile_b(B, tile_b, K, N, x_bytes, out_bytes, w_bytes):
    """Pick a batch tile: big (amortize per-step cost), %16, >=2 grid steps when
    the batch is large enough (v7x dual-TC), and within the VMEM budget."""
    if B <= 2 * ROW_ALIGN:
        # Tiny batch: one full-array block (always a legal block shape).
        return B
    tile_b = max(ROW_ALIGN, min(_round_up(tile_b, ROW_ALIGN),
                                _round_up(_cdiv(B, 2), ROW_ALIGN)))

    def vmem_bytes(t):
        # double-buffered x and out tiles + resident weights/bias
        return 2 * t * (K * x_bytes + N * out_bytes) + K * N * w_bytes + N * 4

    while tile_b > ROW_ALIGN and vmem_bytes(tile_b) > VMEM_BUDGET:
        tile_b = max(ROW_ALIGN, _round_up(tile_b // 2, ROW_ALIGN))
    return tile_b


def logistic_regression_forward(x, w_prepared, b_prepared, *,
                                tile_b=8192, out_dtype=jnp.bfloat16):
    """x: [B, K] f32, w_prepared: [K, N], b_prepared: [1, N] -> [B, N] out_dtype."""
    B, K = x.shape
    K2, N = w_prepared.shape
    assert K == K2

    x_bytes = jnp.dtype(x.dtype).itemsize
    out_bytes = jnp.dtype(out_dtype).itemsize
    w_bytes = jnp.dtype(w_prepared.dtype).itemsize
    tile_b = _choose_tile_b(B, tile_b, K, N, x_bytes, out_bytes, w_bytes)
    grid_b = _cdiv(B, tile_b)   # ragged last block handled by Pallas masking

    out = pl.pallas_call(
        linear_kernel,
        out_shape=jax.ShapeDtypeStruct((B, N), out_dtype),
        grid_spec=pltpu.PrefetchScalarGridSpec(
            num_scalar_prefetch=0,
            grid=(grid_b,),
            in_specs=[
                pl.BlockSpec((tile_b, K), lambda i: (i, 0)),   # streamed x tile (f32)
                pl.BlockSpec((K, N), lambda i: (0, 0)),        # resident weights (bf16)
                pl.BlockSpec((1, N), lambda i: (0, 0)),        # resident bias (f32)
            ],
            out_specs=pl.BlockSpec((tile_b, N), lambda i: (i, 0)),
        ),
        compiler_params=pltpu.CompilerParams(
            dimension_semantics=("parallel",),   # batch axis shards across v7x TCs
            vmem_limit_bytes=32 << 20,           # tile_b clamp keeps us well under this
        ),
    )(x, w_prepared, b_prepared)
    return out


if __name__ == "__main__":
    input_dim = 32
    output_dim = 16
    batch = 8

    key = jax.random.PRNGKey(0)
    kx, kw, kb = jax.random.split(key, 3)

    x = jax.random.normal(kx, (batch, input_dim), dtype=jnp.float32)
    # Deterministic init mimicking nn.Linear default (uniform in +-1/sqrt(fan_in)).
    bound = 1.0 / (input_dim ** 0.5)
    weight = jax.random.uniform(
        kw, (output_dim, input_dim), dtype=jnp.float32, minval=-bound, maxval=bound
    )
    bias = jax.random.uniform(
        kb, (output_dim,), dtype=jnp.float32, minval=-bound, maxval=bound
    )

    # One-time parameter prep (outside the per-call hot path).
    w_prep, b_prep = prepare_params(weight, bias)

    out = logistic_regression_forward(x, w_prep, b_prep)
    out = jax.block_until_ready(out)
    assert out.shape == (batch, output_dim)
    assert out.dtype == jnp.bfloat16

    out_f32 = out.astype(jnp.float32)

    # Reference 1: same bf16-rounded operands, f32 accumulate (validates kernel math).
    x_bf = x.astype(jnp.bfloat16).astype(jnp.float32)
    w_bf = weight.astype(jnp.bfloat16).astype(jnp.float32)
    ref_bf = x_bf @ w_bf.T + bias
    assert jnp.allclose(out_f32, ref_bf, atol=2e-2, rtol=2e-2)

    # Reference 2: full-f32 PyTorch nn.Linear semantics (bf16 streaming tolerance).
    ref_f32 = x @ weight.T + bias
    assert jnp.allclose(out_f32, ref_f32, atol=5e-2, rtol=5e-2)

    print("KERNEL_OK")
</pallas_src>

<mosaic_0001>
module attributes {stable_mosaic.version = 11 : i64} {
  func.func @linear_kernel(%arg0: i32, %arg1: memref<8x32xf32, #tpu.memory_space<vmem>>, %arg2: memref<32x16xbf16, #tpu.memory_space<vmem>>, %arg3: memref<1x16xf32, #tpu.memory_space<vmem>>, %arg4: memref<8x16xbf16, #tpu.memory_space<vmem>>) attributes {dimension_semantics = [#tpu.dimension_semantics<parallel>], iteration_bounds = array<i64: 1>, scalar_prefetch = 0 : i64, scratch_operands = 0 : i64, tpu.core_type = #tpu.core_type<tc>, window_params = [{transform_indices = @transform_0, window_bounds = array<i64: 8, 32>}, {pipeline_mode = #tpu.pipeline_mode<synchronous>, transform_indices = @transform_1, window_bounds = array<i64: 32, 16>}, {pipeline_mode = #tpu.pipeline_mode<synchronous>, transform_indices = @transform_2, window_bounds = array<i64: 1, 16>}, {transform_indices = @transform_3, window_bounds = array<i64: 8, 16>}]} {
    %c0 = arith.constant 0 : index
    %c0_0 = arith.constant 0 : index
    %0 = vector.load %arg1[%c0, %c0_0] : memref<8x32xf32, #tpu.memory_space<vmem>>, vector<8x32xf32>
    %1 = arith.truncf %0 : vector<8x32xf32> to vector<8x32xbf16>
    %c0_1 = arith.constant 0 : index
    %c0_2 = arith.constant 0 : index
    %2 = vector.load %arg2[%c0_1, %c0_2] : memref<32x16xbf16, #tpu.memory_space<vmem>>, vector<32x16xbf16>
    %cst = arith.constant dense<0.000000e+00> : vector<8x16xf32>
    %3 = tpu.matmul %1, %2, %cst {dimension_numbers = #tpu.dot_dimension_numbers<[1], [0], [0], [1], [0, 0, 1, 1], [], []>} : vector<8x32xbf16>, vector<32x16xbf16>, vector<8x16xf32> -> vector<8x16xf32>
    %c0_3 = arith.constant 0 : index
    %c0_4 = arith.constant 0 : index
    %4 = vector.load %arg3[%c0_3, %c0_4] : memref<1x16xf32, #tpu.memory_space<vmem>>, vector<1x16xf32>
    %5 = vector.broadcast %4 : vector<1x16xf32> to vector<8x16xf32>
    %6 = arith.addf %3, %5 : vector<8x16xf32>
    %7 = arith.truncf %6 : vector<8x16xf32> to vector<8x16xbf16>
    %c0_5 = arith.constant 0 : index
    %c0_6 = arith.constant 0 : index
    %8 = vector.load %arg4[%c0_5, %c0_6] : memref<8x16xbf16, #tpu.memory_space<vmem>>, vector<8x16xbf16>
    tpu.vector_store %arg4[%c0_5, %c0_6], %7 {strides = array<i32>} : memref<8x16xbf16, #tpu.memory_space<vmem>>, vector<8x16xbf16>,
    return
  }
  func.func @transform_0(%arg0: i32) -> (i32, i32) {
    %c0_i32 = arith.constant 0 : i32
    %c0_i32_0 = arith.constant 0 : i32
    return %arg0, %c0_i32 : i32, i32
  }
  func.func @transform_1(%arg0: i32) -> (i32, i32) {
    %c0_i32 = arith.constant 0 : i32
    %c0_i32_0 = arith.constant 0 : i32
    %c0_i32_1 = arith.constant 0 : i32
    return %c0_i32, %c0_i32_0 : i32, i32
  }
  func.func @transform_2(%arg0: i32) -> (i32, i32) {
    %c0_i32 = arith.constant 0 : i32
    %c0_i32_0 = arith.constant 0 : i32
    %c0_i32_1 = arith.constant 0 : i32
    return %c0_i32, %c0_i32_0 : i32, i32
  }
  func.func @transform_3(%arg0: i32) -> (i32, i32) {
    %c0_i32 = arith.constant 0 : i32
    %c0_i32_0 = arith.constant 0 : i32
    return %arg0, %c0_i32 : i32, i32
  }
}

</mosaic_0001>

<llo_original>
// kernel: tpu_custom_call.1
$region0: #{tpu_custom_call.1}
  #allocation0 [shape = 'u32[]', space=smem, size = 0x4, offset = 0x4, fixed_abs, tag = 'smem constant byte address 0x4 - core index']
  #allocation1 [shape = 'u32[144,128]{1,0:T(1,128)}', space=vmem, size = 0x12000, scoped, tag = 'internal scratch']
  %s0 = inlined_call_operand.vmem [shape: f32[8,32], index: 0, kind: input, shape index: {}]
  %s1 = inlined_call_operand.vmem [shape: bf16[32,16], index: 1, kind: input, shape index: {}]
  %s2 = inlined_call_operand.vmem [shape: f32[1,16], index: 2, kind: input, shape index: {}]
  %s3 = inlined_call_operand.hbm [shape: bf16[8,16], index: 3, kind: output, shape index: {}]
  %s4 = sld [smem:[#allocation0]]
  $region22: #{tpu_custom_call.1} parent=0
    _
  %s6 = ssub.s32 1, %s4
  %s7 = scalar_select 0, %s6, %s4
  $region1: #{tpu_custom_call.1} parent=0
    #allocation2 [shape = 'u8[2048]{0}', space=vmem, size = 0x800, scoped, tag = 'output window, operand 0, single buffered']
    #allocation3 [shape = 's32[1]{0}', space=sflag, size = 0x4, scoped, tag = 'scoped memory for tpu_custom_call.1']
    %8 = vsyncpa [#allocation3], 0
    // Predicated region
    $region2: #{tpu_custom_call.1} parent=1 // pred_check
      _
    $region3: #{tpu_custom_call.1} parent=1 // pred_check_branch
      %10 = sbr.rel (0) target = $region5
    $region4: #{tpu_custom_call.1} parent=1 // pred_region
      _
    $region5: #{tpu_custom_call.1} parent=1 // pred_fallthru
      _
    // Predicated region
    $region6: #{tpu_custom_call.1} parent=1 // pred_check
      _
    $region7: #{tpu_custom_call.1} parent=1 // pred_check_branch
      %12 = sbr.rel (0) target = $region9
    $region8: #{tpu_custom_call.1} parent=1 // pred_region
      _
    $region9: #{tpu_custom_call.1} parent=1 // pred_fallthru
      _
    // Predicated region
    $region10: #{tpu_custom_call.1} parent=1 // pred_check
      _
    $region11: #{tpu_custom_call.1} parent=1 // pred_check_branch
      %14 = sbr.rel (0) target = $region13
    $region12: #{tpu_custom_call.1} parent=1 // pred_region
      _
    $region13: #{tpu_custom_call.1} parent=1 // pred_fallthru
      _
    %v16 = vld [vmem:[%s0] sm:$0xff]
    %v17 = vpack.c.bf16 %v16, %v16
    %v18 = vld [vmem:[%s1] sm:$0xf]
    %v19 = vld [vmem:[%s1 + $0x4] sm:$0xf]
    %v20 = vld [vmem:[%s1 + $0x8] sm:$0xf]
    %v21 = vld [vmem:[%s1 + $0xc] sm:$0xf]
    %v22 = vld [vmem:[%s2] sm:$0x1]
    %v24 = vlaneseq
    %v25 = vshrl.u32 %v24, 7
    %v26 = vsub.s32 0, %v25
    %v27 = vrot.slane %v22, %v26
    %v33 = vunpack.c.l.b16 %v18
    %v34 = vunpack.c.l.b16 %v19
    %v35 = vunpack.c.l.b16 %v20
    %v36 = vunpack.c.l.b16 %v21
    %v37 = vpack.c.b16 %v34, %v33
    %v38 = vpack.c.b16 %v36, %v35
    %vm41 = vcmask 261120
    %v43 = vsel %vm41, %v17, 0
    %45 = vmatprep.subr.bf16.mxu0 0
    %46 = vmatpush1.bf16.msra.mxu0 0
    %47 = vmatprep.subr.bf16.mxu0 0
    %48 = vmatpush1.bf16.msra.mxu0 0
    %49 = vmatprep.subr.bf16.mxu0 0
    %50 = vmatpush1.bf16.msra.mxu0 0
    %51 = vmatprep.subr.bf16.mxu0 0
    %52 = vmatpush1.bf16.msra.mxu0 0
    %53 = vmatprep.subr.bf16.mxu0 0
    %54 = vmatpush1.bf16.msra.mxu0 0
    %55 = vmatprep.subr.bf16.mxu0 0
    %56 = vmatpush1.bf16.msra.mxu0 0
    %57 = vmatprep.subr.bf16.mxu0 0
    %58 = vmatpush1.bf16.msra.mxu0 %v38
    %59 = vmatprep.subr.bf16.mxu0 0
    %60 = vmatpush1.bf16.msra.mxu0 %v37
    %61 = vmatprep.subr.bf16.mxu0 0
    %62 = vmatpush2.bf16.msra.mxu0 0
    %63 = vmatprep.subr.bf16.mxu0 0
    %64 = vmatpush2.bf16.msra.mxu0 0
    %65 = vmatprep.subr.bf16.mxu0 0
    %66 = vmatpush2.bf16.msra.mxu0 0
    %67 = vmatprep.subr.bf16.mxu0 0
    %68 = vmatpush2.bf16.msra.mxu0 0
    %69 = vmatprep.subr.bf16.mxu0 0
    %70 = vmatpush2.bf16.msra.mxu0 0
    %71 = vmatprep.subr.bf16.mxu0 0
    %72 = vmatpush2.bf16.msra.mxu0 0
    %73 = vmatprep.subr.bf16.mxu0 0
    %74 = vmatpush2.bf16.msra.mxu0 0
    %75 = vmatprep.subr.bf16.mxu0 0
    %76 = vmatpush2.bf16.msra.mxu0 0
    %77 = vmatprep.mubr.bf16.mxu0 0
    %78 = vmatmul.mubr.bf16.gmra.mxu0 %v43
    %v79 = vpop.f32.mrf.mxu0
    %v80 = vadd.f32 %v27, %v79
    %v81 = vpop.f32.mrf.mxu0
    %v82 = vpop.f32.mrf.mxu0
    %v83 = vpop.f32.mrf.mxu0
    %84 = vdwg.mxu0
    %v85 = vpack.c.bf16 %v80, %v80
    %vm86 = vcmask 125952
    %87 = vst.msk [vmem:[#allocation2] sm:$0xf] %vm86, %v85
    // Predicated region
    $region14: #{tpu_custom_call.1} parent=1 // pred_check
      _
    $region15: #{tpu_custom_call.1} parent=1 // pred_check_branch
      %89 = sbr.rel (0) target = $region17
    $region16: #{tpu_custom_call.1} parent=1 // pred_region
      %s91 = ssub.s32 64, 64
      %92 = vsyncadd [#allocation3], %s91
      %s94 = sshll.u32 [#allocation2], 4
      %s95 = int_to_ptr.vmem [resolvable:$true] %s94
      %97 = dma.vmem_to_hbm [thread:$0]  %s95, 64, %s3, [#allocation3]
    $region17: #{tpu_custom_call.1} parent=1 // pred_fallthru
      _
    // Predicated region
    $region18: #{tpu_custom_call.1} parent=1 // pred_check
      _
    $region19: #{tpu_custom_call.1} parent=1 // pred_check_branch
      %99 = sbr.rel (0) target = $region21
    $region20: #{tpu_custom_call.1} parent=1 // pred_region
      %100 = dma.done [#allocation3], 64
    $region21: #{tpu_custom_call.1} parent=1 // pred_fallthru
      _
    %101 = vsyncpa [#allocation3], 1

</llo_original>
